<compile_context>
chip_gen: v5e
topology: v5e:2x2
jax: 0.10.0
libtpu: 0.0.40
codegen_flags: <defaults>
</compile_context>

<pallas_src>
import functools

import jax
import jax.numpy as jnp
from jax.experimental import pallas as pl
from jax.experimental.pallas import tpu as pltpu


def _context_block_kernel(x_ref, p_ref, wm_ref, out_ref, *, hid, hw_valid):
    """One grid step: Bt batch elements, full (C, HWp) resident in VMEM.

    p_ref packs the small parameters into a single (2*hid + 5, C) f32 tile:
      rows 0 .. hid-1      : first 1x1 conv  w1   (hid, C)
      rows hid .. 2*hid-1  : last 1x1 conv^T w2T  (hid, C)
      row 2*hid            : last conv bias  b2   (C,)
      row 2*hid + 1        : first conv bias b1   (hid,)  zero-padded to C
      row 2*hid + 2        : LayerNorm gamma      (hid,)  zero-padded to C
      row 2*hid + 3        : LayerNorm beta       (hid,)  zero-padded to C
      row 2*hid + 4        : conv_mask bias  bm   scalar at lane 0
    wm_ref is the conv_mask weight as a sublane-major (C, 1) column.
    """
    f32 = jnp.float32

    w1    = p_ref[0:hid, :]                     # (hid, C)
    w2t   = p_ref[hid:2 * hid, :]               # (hid, C)
    b2    = p_ref[2 * hid, :]                   # (C,)
    b1    = p_ref[2 * hid + 1, :hid]            # (hid,)
    gamma = p_ref[2 * hid + 2, :hid]            # (hid,)
    beta  = p_ref[2 * hid + 3, :hid]            # (hid,)
    bm    = p_ref[2 * hid + 4, 0:1]             # (1,)
    wm    = wm_ref[...]                         # (C, 1) broadcasts over HW lanes

    hw_pad = x_ref.shape[-1]

    # ---- spatial_pool (pool='att'), pass 1: conv_mask logits (VPU + XLU) ---
    logits = jnp.sum(x_ref[...].astype(f32) * wm[None, :, :], axis=1) + bm  # (Bt, HWp)
    if hw_pad != hw_valid:  # mask padded lanes out of the softmax
        lane = jax.lax.broadcasted_iota(jnp.int32, logits.shape, 1)
        logits = jnp.where(lane < hw_valid, logits, jnp.finfo(f32).min)

    # Deferred-normalisation softmax: pool with e = exp(logits - m), then
    # rescale the tiny (Bt, C) context by 1/sum(e) (exact; (Bt,1) is cheap).
    m = jnp.max(logits, axis=-1, keepdims=True)                  # (Bt, 1)
    e = jnp.exp(logits - m)                                      # (Bt, HWp)
    inv_denom = 1.0 / jnp.sum(e, axis=-1, keepdims=True)         # (Bt, 1)

    # ---- pass 2: attention-pooled context (lane reduce) --------------------
    ctx = jnp.sum(x_ref[...].astype(f32) * e[:, None, :], axis=-1) * inv_denom  # (Bt, C)

    # ---- channel_add_conv: 1x1 conv -> LayerNorm([hid,1,1]) -> ReLU -> 1x1 conv
    # hid and Bt are tiny; keep everything on the VPU (no degenerate matmuls).
    h = jnp.sum(ctx[:, None, :] * w1[None, :, :], axis=-1) + b1[None, :]        # (Bt, hid)
    mu = jnp.mean(h, axis=-1, keepdims=True)
    var = jnp.mean(jnp.square(h - mu), axis=-1, keepdims=True)
    hn = (h - mu) * jax.lax.rsqrt(var + 1e-5)
    hn = hn * gamma[None, :] + beta[None, :]
    hn = jnp.maximum(hn, 0.0)                                                   # ReLU
    add_term = jnp.sum(hn[:, :, None] * w2t[None, :, :], axis=1) + b2[None, :]  # (Bt, C)

    # ---- pass 3: residual add in the I/O dtype (bf16 VALU on v6e/v7x) ------
    out_ref[...] = x_ref[...] + add_term.astype(out_ref.dtype)[:, :, None]


def _pack_params(params, C, hid):
    """Pack the 8 small parameter arrays into one (2*hid+5, C) f32 tile plus a
    sublane-major (C, 1) conv_mask weight column."""
    wm, bm, w1, b1, gamma, beta, w2, b2 = params
    f32 = jnp.float32

    def row_pad(v):                                  # (n,) -> (1, C) zero padded
        v = v.reshape(-1).astype(f32)
        return jnp.zeros((1, C), f32).at[0, :v.shape[0]].set(v)

    rows = [
        w1.reshape(hid, C).astype(f32),              # rows 0 .. hid-1
        w2.T.reshape(hid, C).astype(f32),            # rows hid .. 2*hid-1
        b2.reshape(1, C).astype(f32),                # row 2*hid
        row_pad(b1),                                 # row 2*hid + 1
        row_pad(gamma),                              # row 2*hid + 2
        row_pad(beta),                               # row 2*hid + 3
        row_pad(bm),                                 # row 2*hid + 4
    ]
    packed = jnp.concatenate(rows, axis=0)           # (2*hid + 5, C)
    wm_col = wm.reshape(C, 1).astype(f32)            # (C, 1), lane-broadcast friendly
    return packed, wm_col


def _vmem_capacity_bytes():
    try:
        return int(pltpu.get_tpu_info().vmem_capacity_bytes)
    except Exception:
        return 64 * 2 ** 20  # conservative (v7x-sized) fallback


def _choose_batch_tile(B, C, HWp, itemsize, vmem_capacity):
    """Aim for >= 8 grid steps (restores DMA/compute pipelining and feeds both
    v7x TensorCores), subject to a ~512 KiB per-block floor and a
    generation-aware VMEM data budget."""
    per_batch_io = C * HWp * itemsize                 # one in (or out) block row
    per_batch_f32 = C * HWp * 4                       # in-kernel f32 temporaries
    per_batch_cost = 4 * per_batch_io + 3 * per_batch_f32  # 2x in + 2x out + temps

    data_budget = max(8 * 2 ** 20, min(48 * 2 ** 20, vmem_capacity // 3))
    cap = max(1, data_budget // per_batch_cost)

    bt_steps = pl.cdiv(B, 8)                          # -> at least ~8 grid steps
    bt_floor = pl.cdiv(512 * 1024, per_batch_io)      # ~512 KiB block floor
    bt = max(1, min(B, cap, max(bt_steps, bt_floor)))
    while B % bt:                                     # clean, exact blocking
        bt -= 1
    return bt


def context_block_forward(x, params):
    """x: (B, C, H, W) NCHW.  Returns x + channel_add_term (GCNet 'att'+'channel_add')."""
    B, C, H, W = x.shape
    HW = H * W
    hid = params[2].shape[0]                          # planes // ratio

    # Lane-dense layout: pad HW up to a multiple of 128 so every full-block
    # load/store is an unmasked vld/vst.  Padded lanes are masked in-kernel.
    HWp = ((HW + 127) // 128) * 128
    x2 = x.reshape(B, C, HW)
    if HWp != HW:
        x2 = jnp.pad(x2, ((0, 0), (0, 0), (0, HWp - HW)))

    packed, wm_col = _pack_params(params, C, hid)
    NP = packed.shape[0]

    vmem_capacity = _vmem_capacity_bytes()
    itemsize = x.dtype.itemsize
    Bt = _choose_batch_tile(B, C, HWp, itemsize, vmem_capacity)
    grid = (B // Bt,)

    # VMEM budget: double-buffered in/out blocks + ~3 block-sized f32 temps
    # (x*wm, x*e, per-pass casts) + resident params + headroom, always capped
    # at the physical capacity of this chip minus 8 MiB.
    io_block = Bt * C * HWp * itemsize
    f32_block = Bt * C * HWp * 4
    param_bytes = (((NP + 7) // 8 * 8) * ((C + 127) // 128 * 128) * 4
                   + ((C + 7) // 8 * 8) * 128 * 4)
    needed = 4 * io_block + 3 * f32_block + 2 * param_bytes + 2 * 2 ** 20
    vmem_limit = int(min(vmem_capacity - 8 * 2 ** 20, max(needed, 32 * 2 ** 20)))

    cost = pl.CostEstimate(
        flops=5 * B * C * HWp,
        transcendentals=B * HWp,
        bytes_accessed=2 * B * C * HWp * itemsize + 2 * param_bytes,
    )

    out = pl.pallas_call(
        functools.partial(_context_block_kernel, hid=hid, hw_valid=HW),
        out_shape=jax.ShapeDtypeStruct((B, C, HWp), x.dtype),
        grid_spec=pltpu.PrefetchScalarGridSpec(
            num_scalar_prefetch=0,
            grid=grid,
            in_specs=[
                pl.BlockSpec((Bt, C, HWp), lambda i: (i, 0, 0)),
                pl.BlockSpec((NP, C), lambda i: (0, 0)),   # params stay resident
                pl.BlockSpec((C, 1), lambda i: (0, 0)),    # conv_mask weight column
            ],
            out_specs=pl.BlockSpec((Bt, C, HWp), lambda i: (i, 0, 0)),
        ),
        input_output_aliases={0: 0},   # every output element is written
        compiler_params=pltpu.CompilerParams(
            dimension_semantics=("parallel",),
            vmem_limit_bytes=vmem_limit,
        ),
        cost_estimate=cost,
    )(x2, packed, wm_col)

    if HWp != HW:
        out = out[:, :, :HW]
    return out.reshape(B, C, H, W)


def reference_forward(x, params):
    """Pure-JAX reference mirroring the PyTorch forward exactly."""
    wm, bm, w1, b1, gamma, beta, w2, b2 = params
    B, C, H, W = x.shape
    xf = x.reshape(B, C, H * W)
    logits = jnp.einsum('oc,bch->bh', wm, xf) + bm[0, 0]      # conv_mask
    attn = jax.nn.softmax(logits, axis=-1)                    # softmax(dim=2)
    ctx = jnp.einsum('bch,bh->bc', xf, attn)                  # matmul pooling
    h = ctx @ w1.T + b1[:, 0]
    mu = h.mean(-1, keepdims=True)
    var = ((h - mu) ** 2).mean(-1, keepdims=True)
    hn = (h - mu) / jnp.sqrt(var + 1e-5) * gamma[:, 0] + beta[:, 0]
    hn = jnp.maximum(hn, 0.0)
    add = hn @ w2.T + b2[:, 0]
    return x + add[:, :, None, None]


if __name__ == "__main__":
    # Small shapes consistent with the module: inplanes=planes=32, ratio=8.
    B, C, H, W = 2, 32, 16, 16
    HID = C // 8  # planes // ratio

    key = jax.random.PRNGKey(0)
    ks = jax.random.split(key, 9)
    f32 = jnp.float32

    x = jax.random.normal(ks[0], (B, C, H, W), dtype=f32)

    # Deterministic synthetic parameters (see note at top about zero-init).
    wm    = jax.random.normal(ks[1], (1, C),   dtype=f32) * 0.1   # conv_mask weight (1,C,1,1)
    bm    = jax.random.normal(ks[2], (1, 1),   dtype=f32) * 0.1   # conv_mask bias
    w1    = jax.random.normal(ks[3], (HID, C), dtype=f32) * 0.1   # first 1x1 conv
    b1    = jax.random.normal(ks[4], (HID, 1), dtype=f32) * 0.1
    gamma = 1.0 + jax.random.normal(ks[5], (HID, 1), dtype=f32) * 0.1  # LayerNorm weight
    beta  = jax.random.normal(ks[6], (HID, 1), dtype=f32) * 0.1        # LayerNorm bias
    w2    = jax.random.normal(ks[7], (C, HID), dtype=f32) * 0.1   # last 1x1 conv
    b2    = jax.random.normal(ks[8], (C, 1),   dtype=f32) * 0.1

    params = (wm, bm, w1, b1, gamma, beta, w2, b2)

    out = context_block_forward(x, params)
    out = jax.block_until_ready(out)

    ref = reference_forward(x, params)
    assert out.shape == (B, C, H, W)
    # Exact reciprocal is used for the softmax denominator; the only remaining
    # differences are f32 reduction-order effects.
    assert jnp.allclose(out, ref, atol=2e-4, rtol=2e-4), "mismatch vs JAX reference"

    print("KERNEL_OK")
</pallas_src>

<mosaic_0001>
module attributes {stable_mosaic.version = 11 : i64} {
  func.func @_context_block_kernel(%arg0: i32, %arg1: memref<2x32x256xf32, #tpu.memory_space<vmem>>, %arg2: memref<13x32xf32, #tpu.memory_space<vmem>>, %arg3: memref<32x1xf32, #tpu.memory_space<vmem>>, %arg4: memref<2x32x256xf32, #tpu.memory_space<vmem>>) attributes {dimension_semantics = [#tpu.dimension_semantics<parallel>], iteration_bounds = array<i64: 1>, scalar_prefetch = 0 : i64, scratch_operands = 0 : i64, tpu.core_type = #tpu.core_type<tc>, window_params = [{transform_indices = @transform_0, window_bounds = array<i64: 2, 32, 256>}, {pipeline_mode = #tpu.pipeline_mode<synchronous>, transform_indices = @transform_1, window_bounds = array<i64: 13, 32>}, {pipeline_mode = #tpu.pipeline_mode<synchronous>, transform_indices = @transform_2, window_bounds = array<i64: 32, 1>}, {transform_indices = @transform_3, window_bounds = array<i64: 2, 32, 256>}]} {
    %c0 = arith.constant 0 : index
    %c0_0 = arith.constant 0 : index
    %0 = vector.load %arg2[%c0, %c0_0] : memref<13x32xf32, #tpu.memory_space<vmem>>, vector<4x32xf32>
    %c4 = arith.constant 4 : index
    %c0_1 = arith.constant 0 : index
    %1 = vector.load %arg2[%c4, %c0_1] : memref<13x32xf32, #tpu.memory_space<vmem>>, vector<4x32xf32>
    %c8 = arith.constant 8 : index
    %c0_2 = arith.constant 0 : index
    %2 = vector.load %arg2[%c8, %c0_2] : memref<13x32xf32, #tpu.memory_space<vmem>>, vector<1x32xf32>
    %3 = vector.shape_cast %2 : vector<1x32xf32> to vector<32xf32>
    %c9 = arith.constant 9 : index
    %c0_3 = arith.constant 0 : index
    %4 = vector.load %arg2[%c9, %c0_3] : memref<13x32xf32, #tpu.memory_space<vmem>>, vector<1x4xf32>
    %5 = vector.shape_cast %4 : vector<1x4xf32> to vector<4xf32>
    %c10 = arith.constant 10 : index
    %c0_4 = arith.constant 0 : index
    %6 = vector.load %arg2[%c10, %c0_4] : memref<13x32xf32, #tpu.memory_space<vmem>>, vector<1x4xf32>
    %7 = vector.shape_cast %6 : vector<1x4xf32> to vector<4xf32>
    %c11 = arith.constant 11 : index
    %c0_5 = arith.constant 0 : index
    %8 = vector.load %arg2[%c11, %c0_5] : memref<13x32xf32, #tpu.memory_space<vmem>>, vector<1x4xf32>
    %9 = vector.shape_cast %8 : vector<1x4xf32> to vector<4xf32>
    %c12 = arith.constant 12 : index
    %c0_6 = arith.constant 0 : index
    %10 = vector.load %arg2[%c12, %c0_6] : memref<13x32xf32, #tpu.memory_space<vmem>>, vector<1x1xf32>
    %11 = vector.shape_cast %10 : vector<1x1xf32> to vector<1xf32>
    %c0_7 = arith.constant 0 : index
    %c0_8 = arith.constant 0 : index
    %12 = vector.load %arg3[%c0_7, %c0_8] : memref<32x1xf32, #tpu.memory_space<vmem>>, vector<32x1xf32>
    %c0_9 = arith.constant 0 : index
    %c0_10 = arith.constant 0 : index
    %c0_11 = arith.constant 0 : index
    %13 = vector.load %arg1[%c0_9, %c0_10, %c0_11] : memref<2x32x256xf32, #tpu.memory_space<vmem>>, vector<2x32x256xf32>
    %14 = vector.shape_cast %12 : vector<32x1xf32> to vector<1x32x1xf32>
    %15 = vector.broadcast %14 : vector<1x32x1xf32> to vector<2x32x256xf32>
    %16 = arith.mulf %13, %15 : vector<2x32x256xf32>
    %cst = arith.constant dense<0.000000e+00> : vector<2x256xf32>
    %17 = vector.multi_reduction <add>, %16, %cst [1] : vector<2x32x256xf32> to vector<2x256xf32>
    %18 = vector.shape_cast %11 : vector<1xf32> to vector<1x1xf32>
    %19 = vector.broadcast %18 : vector<1x1xf32> to vector<2x256xf32>
    %20 = arith.addf %17, %19 : vector<2x256xf32>
    %cst_12 = arith.constant dense<0xFF800000> : vector<2xf32>
    %21 = vector.multi_reduction <maximumf>, %20, %cst_12 [1] : vector<2x256xf32> to vector<2xf32>
    %22 = vector.shape_cast %21 : vector<2xf32> to vector<2x1xf32>
    %23 = vector.broadcast %22 : vector<2x1xf32> to vector<2x256xf32>
    %24 = arith.subf %20, %23 : vector<2x256xf32>
    %25 = math.exp %24 : vector<2x256xf32>
    %cst_13 = arith.constant dense<0.000000e+00> : vector<2xf32>
    %26 = vector.multi_reduction <add>, %25, %cst_13 [1] : vector<2x256xf32> to vector<2xf32>
    %27 = vector.shape_cast %26 : vector<2xf32> to vector<2x1xf32>
    %cst_14 = arith.constant 1.000000e+00 : f32
    %28 = vector.broadcast %cst_14 : f32 to vector<2x1xf32>
    %29 = arith.divf %28, %27 : vector<2x1xf32>
    %c0_15 = arith.constant 0 : index
    %c0_16 = arith.constant 0 : index
    %c0_17 = arith.constant 0 : index
    %30 = vector.load %arg1[%c0_15, %c0_16, %c0_17] : memref<2x32x256xf32, #tpu.memory_space<vmem>>, vector<2x32x256xf32>
    %31 = vector.shape_cast %25 : vector<2x256xf32> to vector<2x1x256xf32>
    %32 = vector.broadcast %31 : vector<2x1x256xf32> to vector<2x32x256xf32>
    %33 = arith.mulf %30, %32 : vector<2x32x256xf32>
    %cst_18 = arith.constant dense<0.000000e+00> : vector<2x32xf32>
    %34 = vector.multi_reduction <add>, %33, %cst_18 [2] : vector<2x32x256xf32> to vector<2x32xf32>
    %35 = vector.broadcast %29 : vector<2x1xf32> to vector<2x32xf32>
    %36 = arith.mulf %34, %35 : vector<2x32xf32>
    %37 = vector.shape_cast %36 : vector<2x32xf32> to vector<2x1x32xf32>
    %38 = vector.shape_cast %0 : vector<4x32xf32> to vector<1x4x32xf32>
    %39 = vector.broadcast %37 : vector<2x1x32xf32> to vector<2x4x32xf32>
    %40 = vector.broadcast %38 : vector<1x4x32xf32> to vector<2x4x32xf32>
    %41 = arith.mulf %39, %40 : vector<2x4x32xf32>
    %cst_19 = arith.constant dense<0.000000e+00> : vector<2x4xf32>
    %42 = vector.multi_reduction <add>, %41, %cst_19 [2] : vector<2x4x32xf32> to vector<2x4xf32>
    %43 = vector.shape_cast %5 : vector<4xf32> to vector<1x4xf32>
    %44 = vector.broadcast %43 : vector<1x4xf32> to vector<2x4xf32>
    %45 = arith.addf %42, %44 : vector<2x4xf32>
    %cst_20 = arith.constant dense<0.000000e+00> : vector<2xf32>
    %46 = vector.multi_reduction <add>, %45, %cst_20 [1] : vector<2x4xf32> to vector<2xf32>
    %47 = vector.shape_cast %46 : vector<2xf32> to vector<2x1xf32>
    %cst_21 = arith.constant 4.000000e+00 : f32
    %48 = vector.broadcast %cst_21 : f32 to vector<2x1xf32>
    %49 = arith.divf %47, %48 : vector<2x1xf32>
    %50 = vector.broadcast %49 : vector<2x1xf32> to vector<2x4xf32>
    %51 = arith.subf %45, %50 : vector<2x4xf32>
    %52 = arith.mulf %51, %51 : vector<2x4xf32>
    %cst_22 = arith.constant dense<0.000000e+00> : vector<2xf32>
    %53 = vector.multi_reduction <add>, %52, %cst_22 [1] : vector<2x4xf32> to vector<2xf32>
    %54 = vector.shape_cast %53 : vector<2xf32> to vector<2x1xf32>
    %cst_23 = arith.constant 4.000000e+00 : f32
    %55 = vector.broadcast %cst_23 : f32 to vector<2x1xf32>
    %56 = arith.divf %54, %55 : vector<2x1xf32>
    %57 = vector.broadcast %49 : vector<2x1xf32> to vector<2x4xf32>
    %58 = arith.subf %45, %57 : vector<2x4xf32>
    %cst_24 = arith.constant 9.99999974E-6 : f32
    %59 = vector.broadcast %cst_24 : f32 to vector<2x1xf32>
    %60 = arith.addf %56, %59 : vector<2x1xf32>
    %61 = math.rsqrt %60 : vector<2x1xf32>
    %62 = vector.broadcast %61 : vector<2x1xf32> to vector<2x4xf32>
    %63 = arith.mulf %58, %62 : vector<2x4xf32>
    %64 = vector.shape_cast %7 : vector<4xf32> to vector<1x4xf32>
    %65 = vector.broadcast %64 : vector<1x4xf32> to vector<2x4xf32>
    %66 = arith.mulf %63, %65 : vector<2x4xf32>
    %67 = vector.shape_cast %9 : vector<4xf32> to vector<1x4xf32>
    %68 = vector.broadcast %67 : vector<1x4xf32> to vector<2x4xf32>
    %69 = arith.addf %66, %68 : vector<2x4xf32>
    %cst_25 = arith.constant 0.000000e+00 : f32
    %70 = vector.broadcast %cst_25 : f32 to vector<2x4xf32>
    %71 = arith.maximumf %69, %70 : vector<2x4xf32>
    %72 = vector.shape_cast %71 : vector<2x4xf32> to vector<2x4x1xf32>
    %73 = vector.shape_cast %1 : vector<4x32xf32> to vector<1x4x32xf32>
    %74 = vector.broadcast %72 : vector<2x4x1xf32> to vector<2x4x32xf32>
    %75 = vector.broadcast %73 : vector<1x4x32xf32> to vector<2x4x32xf32>
    %76 = arith.mulf %74, %75 : vector<2x4x32xf32>
    %cst_26 = arith.constant dense<0.000000e+00> : vector<2x32xf32>
    %77 = vector.multi_reduction <add>, %76, %cst_26 [1] : vector<2x4x32xf32> to vector<2x32xf32>
    %78 = vector.shape_cast %3 : vector<32xf32> to vector<1x32xf32>
    %79 = vector.broadcast %78 : vector<1x32xf32> to vector<2x32xf32>
    %80 = arith.addf %77, %79 : vector<2x32xf32>
    %c0_27 = arith.constant 0 : index
    %c0_28 = arith.constant 0 : index
    %c0_29 = arith.constant 0 : index
    %81 = vector.load %arg1[%c0_27, %c0_28, %c0_29] : memref<2x32x256xf32, #tpu.memory_space<vmem>>, vector<2x32x256xf32>
    %82 = vector.shape_cast %80 : vector<2x32xf32> to vector<2x32x1xf32>
    %83 = vector.broadcast %82 : vector<2x32x1xf32> to vector<2x32x256xf32>
    %84 = arith.addf %81, %83 : vector<2x32x256xf32>
    %c0_30 = arith.constant 0 : index
    %c0_31 = arith.constant 0 : index
    %c0_32 = arith.constant 0 : index
    %85 = vector.load %arg4[%c0_30, %c0_31, %c0_32] : memref<2x32x256xf32, #tpu.memory_space<vmem>>, vector<2x32x256xf32>
    tpu.vector_store %arg4[%c0_30, %c0_31, %c0_32], %84 {strides = array<i32>} : memref<2x32x256xf32, #tpu.memory_space<vmem>>, vector<2x32x256xf32>,
    return
  }
  func.func @transform_0(%arg0: i32) -> (i32, i32, i32) {
    %c0_i32 = arith.constant 0 : i32
    %c0_i32_0 = arith.constant 0 : i32
    %c0_i32_1 = arith.constant 0 : i32
    return %arg0, %c0_i32, %c0_i32_0 : i32, i32, i32
  }
  func.func @transform_1(%arg0: i32) -> (i32, i32) {
    %c0_i32 = arith.constant 0 : i32
    %c0_i32_0 = arith.constant 0 : i32
    %c0_i32_1 = arith.constant 0 : i32
    return %c0_i32, %c0_i32_0 : i32, i32
  }
  func.func @transform_2(%arg0: i32) -> (i32, i32) {
    %c0_i32 = arith.constant 0 : i32
    %c0_i32_0 = arith.constant 0 : i32
    %c0_i32_1 = arith.constant 0 : i32
    return %c0_i32, %c0_i32_0 : i32, i32
  }
  func.func @transform_3(%arg0: i32) -> (i32, i32, i32) {
    %c0_i32 = arith.constant 0 : i32
    %c0_i32_0 = arith.constant 0 : i32
    %c0_i32_1 = arith.constant 0 : i32
    return %arg0, %c0_i32, %c0_i32_0 : i32, i32, i32
  }
}

</mosaic_0001>

<llo_original>
// kernel: tpu_custom_call.1
$region0: #{tpu_custom_call.1}
  #allocation0 [shape = 'u32[]', space=smem, size = 0x4, offset = 0x4, fixed_abs, tag = 'smem constant byte address 0x4 - core index']
  #allocation1 [shape = 'u32[72,128]{1,0:T(1,128)}', space=vmem, size = 0x9000, scoped, tag = 'internal scratch']
  %s0 = inlined_call_operand.hbm [shape: f32[2,32,256], index: 0, kind: input, shape index: {}, may-alias: {0,3}]
  %s1 = inlined_call_operand.vmem [shape: f32[13,32], index: 1, kind: input, shape index: {}]
  %s2 = inlined_call_operand.vmem [shape: f32[32,1], index: 2, kind: input, shape index: {}]
  %s3 = inlined_call_operand.hbm [shape: f32[2,32,256], index: 3, kind: output, shape index: {}, may-alias: {0,3}]
  %s4 = sld [smem:[#allocation0]]
  $region26: #{tpu_custom_call.1} parent=0
    _
  %s6 = ssub.s32 1, %s4
  %s7 = scalar_select 0, %s6, %s4
  $region1: #{tpu_custom_call.1} parent=0
    #allocation2 [shape = 'u8[65536]{0}', space=vmem, size = 0x10000, scoped, tag = 'input window, operand 0, single buffered']
    #allocation3 [shape = 's32[1]{0}', space=sflag, size = 0x4, scoped, tag = 'scoped memory for tpu_custom_call.1']
    #allocation4 [shape = 's32[1]{0}', space=sflag, size = 0x4, scoped, tag = 'scoped memory for tpu_custom_call.1']
    #allocation5 [shape = 'u8[65536]{0}', space=vmem, size = 0x10000, scoped, tag = 'output window, operand 0, single buffered']
    %8 = vsyncpa [#allocation3], 0
    %9 = vsyncpa [#allocation4], 0
    // Predicated region
    $region2: #{tpu_custom_call.1} parent=1 // pred_check
      _
    $region3: #{tpu_custom_call.1} parent=1 // pred_check_branch
      %11 = sbr.rel (0) target = $region5
    $region4: #{tpu_custom_call.1} parent=1 // pred_region
      %13 = vsyncadd [#allocation3], 0
      %s14 = sshll.u32 %s0, 4
      %s15 = int_to_ptr.hbm [resolvable:$true] %s14
      %s16 = sshll.u32 [#allocation2], 4
      %s17 = int_to_ptr.vmem [resolvable:$true] %s16
      %22 = dma.hbm_to_vmem [thread:$0]  %s15, 2048, %s17, [#allocation3], 256, 256, 16
    $region5: #{tpu_custom_call.1} parent=1 // pred_fallthru
      _
    // Predicated region
    $region6: #{tpu_custom_call.1} parent=1 // pred_check
      _
    $region7: #{tpu_custom_call.1} parent=1 // pred_check_branch
      %24 = sbr.rel (0) target = $region9
    $region8: #{tpu_custom_call.1} parent=1 // pred_region
      _
    $region9: #{tpu_custom_call.1} parent=1 // pred_fallthru
      _
    // Predicated region
    $region10: #{tpu_custom_call.1} parent=1 // pred_check
      _
    $region11: #{tpu_custom_call.1} parent=1 // pred_check_branch
      %26 = sbr.rel (0) target = $region13
    $region12: #{tpu_custom_call.1} parent=1 // pred_region
      _
    $region13: #{tpu_custom_call.1} parent=1 // pred_fallthru
      _
    // Predicated region
    $region14: #{tpu_custom_call.1} parent=1 // pred_check
      _
    $region15: #{tpu_custom_call.1} parent=1 // pred_check_branch
      %28 = sbr.rel (0) target = $region17
    $region16: #{tpu_custom_call.1} parent=1 // pred_region
      %30 = dma.done [#allocation3], 2048
    $region17: #{tpu_custom_call.1} parent=1 // pred_fallthru
      _
    %v31 = vld [vmem:[%s1] sm:$0xf]
    %v32 = vld [vmem:[%s1 + $0x4] sm:$0xf]
    %v33 = vld [vmem:[%s1 + $0x8] sm:$0x1]
    %v34 = vld [vmem:[%s1 + $0x9] sm:$0x1]
    %v35 = vld [vmem:[%s1 + $0xa] sm:$0x1]
    %v36 = vld [vmem:[%s1 + $0xb] sm:$0x1]
    %v37 = vld [vmem:[%s1 + $0xc] sm:$0x1]
    %v38 = vld [vmem:[%s2] sm:$0xff]
    %v39 = vld [vmem:[%s2 + $0x8] sm:$0xff]
    %v40 = vld [vmem:[%s2 + $0x10] sm:$0xff]
    %v41 = vld [vmem:[%s2 + $0x18] sm:$0xff]
    %v42 = vld [vmem:[#allocation2] sm:$0xff]
    %v43 = vld [vmem:[#allocation2 + $0x8] sm:$0xff]
    %v44 = vld [vmem:[#allocation2 + $0x10] sm:$0xff]
    %v45 = vld [vmem:[#allocation2 + $0x18] sm:$0xff]
    %v46 = vld [vmem:[#allocation2 + $0x20] sm:$0xff]
    %v47 = vld [vmem:[#allocation2 + $0x28] sm:$0xff]
    %v48 = vld [vmem:[#allocation2 + $0x30] sm:$0xff]
    %v49 = vld [vmem:[#allocation2 + $0x38] sm:$0xff]
    %v50 = vld [vmem:[#allocation2 + $0x40] sm:$0xff]
    %v51 = vld [vmem:[#allocation2 + $0x48] sm:$0xff]
    %v52 = vld [vmem:[#allocation2 + $0x50] sm:$0xff]
    %v53 = vld [vmem:[#allocation2 + $0x58] sm:$0xff]
    %v54 = vld [vmem:[#allocation2 + $0x60] sm:$0xff]
    %v55 = vld [vmem:[#allocation2 + $0x68] sm:$0xff]
    %v56 = vld [vmem:[#allocation2 + $0x70] sm:$0xff]
    %v57 = vld [vmem:[#allocation2 + $0x78] sm:$0xff]
    %59 = vset.pattern.permute.xlu0 0
    %60 = vperm.xlu0 %59, %v38
    %v61 = vpop.permute.xlu0 %60
    %64 = vset.pattern.permute.xlu0 0
    %65 = vperm.xlu0 %64, %v39
    %v66 = vpop.permute.xlu0 %65
    %69 = vset.pattern.permute.xlu0 0
    %70 = vperm.xlu0 %69, %v40
    %v71 = vpop.permute.xlu0 %70
    %74 = vset.pattern.permute.xlu0 0
    %75 = vperm.xlu0 %74, %v41
    %v76 = vpop.permute.xlu0 %75
    %v78 = vmul.f32 %v42, %v61
    %v79 = vmul.f32 %v43, %v61
    %v80 = vmul.f32 %v44, %v66
    %v81 = vmul.f32 %v45, %v66
    %v82 = vmul.f32 %v46, %v71
    %v83 = vmul.f32 %v47, %v71
    %v84 = vmul.f32 %v48, %v76
    %v85 = vmul.f32 %v49, %v76
    %v86 = vmul.f32 %v50, %v61
    %v87 = vmul.f32 %v51, %v61
    %v88 = vmul.f32 %v52, %v66
    %v89 = vmul.f32 %v53, %v66
    %v90 = vmul.f32 %v54, %v71
    %v91 = vmul.f32 %v55, %v71
    %v92 = vmul.f32 %v56, %v76
    %v93 = vmul.f32 %v57, %v76
    %v94 = vadd.f32 %v78, %v80
    %v95 = vadd.f32 %v94, %v82
    %v96 = vadd.f32 %v95, %v84
    %v97 = vrot.slane %v96, 4
    %v98 = vadd.f32 %v96, %v97
    %v99 = vrot.slane %v98, 2
    %v100 = vadd.f32 %v98, %v99
    %v101 = vrot.slane %v100, 1
    %v102 = vadd.f32 %v100, %v101
    %v103 = vadd.f32 %v79, %v81
    %v104 = vadd.f32 %v103, %v83
    %v105 = vadd.f32 %v104, %v85
    %v106 = vrot.slane %v105, 4
    %v107 = vadd.f32 %v105, %v106
    %v108 = vrot.slane %v107, 2
    %v109 = vadd.f32 %v107, %v108
    %v110 = vrot.slane %v109, 1
    %v111 = vadd.f32 %v109, %v110
    %v112 = vadd.f32 %v86, %v88
    %v113 = vadd.f32 %v112, %v90
    %v114 = vadd.f32 %v113, %v92
    %v115 = vrot.slane %v114, 4
    %v116 = vadd.f32 %v114, %v115
    %v117 = vrot.slane %v116, 2
    %v118 = vadd.f32 %v116, %v117
    %v119 = vrot.slane %v118, 1
    %v120 = vadd.f32 %v118, %v119
    %v121 = vadd.f32 %v87, %v89
    %v122 = vadd.f32 %v121, %v91
    %v123 = vadd.f32 %v122, %v93
    %v124 = vrot.slane %v123, 4
    %v125 = vadd.f32 %v123, %v124
    %v126 = vrot.slane %v125, 2
    %v127 = vadd.f32 %v125, %v126
    %v128 = vrot.slane %v127, 1
    %v129 = vadd.f32 %v127, %v128
    %s131 = vtos %v37
    %v132 = vstv %s131
    %v134 = vadd.f32 %v102, %v132
    %v135 = vadd.f32 %v111, %v132
    %v136 = vadd.f32 %v120, %v132
    %v137 = vadd.f32 %v129, %v132
    %vm142 = vcmask 1041409
    %v143 = vsel %vm142, %v136, %v134
    %v144 = vsel %vm142, %v137, %v135
    %vm147 = vcmask 1041408
    %v148 = vsel %vm147, %v143, -inf
    %v149 = vsel %vm147, %v144, -inf
    %v150 = vmax.f32 %v148, %v149
    %151 = vmax.xlane.f32.xlu0 %v150
    %v152 = vpop.xlane.xlu0 %151
    %v154 = vrot.slane %v152, 1
    %v157 = vsub.f32 %v134, %v152
    %v158 = vsub.f32 %v135, %v152
    %v159 = vsub.f32 %v136, %v154
    %v160 = vsub.f32 %v137, %v154
    %v161 = vmul.f32 %v157, 1.442695
    %v162 = vpow.pop %v161
    %v163 = vmul.f32 %v158, 1.442695
    %v164 = vpow.pop %v163
    %v165 = vmul.f32 %v159, 1.442695
    %v166 = vpow.pop %v165
    %v167 = vmul.f32 %v160, 1.442695
    %v168 = vpow.pop %v167
    %v173 = vrot.slane %v166, 7
    %v174 = vsel %vm142, %v173, %v162
    %v175 = vrot.slane %v168, 7
    %v176 = vsel %vm142, %v175, %v164
    %v179 = vsel %vm147, %v174, 0.0
    %v180 = vsel %vm147, %v176, 0.0
    %v181 = vadd.f32 %v179, %v180
    %182 = vadd.xlane.f32.xlu0 %v181
    %v183 = vpop.xlane.xlu0 %182
    %v184 = vrcp.pop %v183
    %v185 = vmul.f32 %v183, %v184
    %v186 = vsub.f32 1.0, %v185
    %v187 = vmul.f32 %v184, %v186
    %v188 = vadd.f32 %v184, %v187
    %vm189 = vweird.f32 %v183
    %vm190 = vweird.f32 %v184
    %vm191 = vmor %vm189, %vm190
    %v192 = vsel %vm191, %v184, %v188
    %v193 = vand.u32 2147483647, %v183
    %vm194 = vcmp.eq.f32.partialorder %v193, 8.507059e+37
    %v195 = vand.u32 %v183, 2147483648
    %v196 = vor.u32 1.1754944e-38, %v195
    %v197 = vsel %vm194, %v196, %v192
    %v198 = vmul.f32 1.0, %v197
    %v199 = vperm.slane %v162, 0
    %v200 = vperm.slane %v164, 0
    %v201 = vperm.slane %v166, 0
    %v202 = vperm.slane %v168, 0
    %v203 = vmul.f32 %v42, %v199
    %v204 = vmul.f32 %v43, %v200
    %v205 = vmul.f32 %v44, %v199
    %v206 = vmul.f32 %v45, %v200
    %v207 = vmul.f32 %v46, %v199
    %v208 = vmul.f32 %v47, %v200
    %v209 = vmul.f32 %v48, %v199
    %v210 = vmul.f32 %v49, %v200
    %v211 = vmul.f32 %v50, %v201
    %v212 = vmul.f32 %v51, %v202
    %v213 = vmul.f32 %v52, %v201
    %v214 = vmul.f32 %v53, %v202
    %v215 = vmul.f32 %v54, %v201
    %v216 = vmul.f32 %v55, %v202
    %v217 = vmul.f32 %v56, %v201
    %v218 = vmul.f32 %v57, %v202
    %v219 = vadd.f32 %v203, %v204
    %220 = vadd.xlane.f32.xlu0 %v219
    %v221 = vpop.xlane.xlu0 %220
    %v222 = vadd.f32 %v205, %v206
    %223 = vadd.xlane.f32.xlu0 %v222
    %v224 = vpop.xlane.xlu0 %223
    %v225 = vadd.f32 %v207, %v208
    %226 = vadd.xlane.f32.xlu0 %v225
    %v227 = vpop.xlane.xlu0 %226
    %v228 = vadd.f32 %v209, %v210
    %229 = vadd.xlane.f32.xlu0 %v228
    %v230 = vpop.xlane.xlu0 %229
    %v231 = vadd.f32 %v211, %v212
    %232 = vadd.xlane.f32.xlu0 %v231
    %v233 = vpop.xlane.xlu0 %232
    %v234 = vadd.f32 %v213, %v214
    %235 = vadd.xlane.f32.xlu0 %v234
    %v236 = vpop.xlane.xlu0 %235
    %v237 = vadd.f32 %v215, %v216
    %238 = vadd.xlane.f32.xlu0 %v237
    %v239 = vpop.xlane.xlu0 %238
    %v240 = vadd.f32 %v217, %v218
    %241 = vadd.xlane.f32.xlu0 %v240
    %v242 = vpop.xlane.xlu0 %241
    %v244 = vperm.slane %v198, 0
    %v245 = vperm.slane %v198, 1
    %v248 = vmul.f32 %v221, %v244
    %v249 = vmul.f32 %v224, %v244
    %v250 = vmul.f32 %v227, %v244
    %v251 = vmul.f32 %v230, %v244
    %v252 = vmul.f32 %v233, %v245
    %v253 = vmul.f32 %v236, %v245
    %v254 = vmul.f32 %v239, %v245
    %v255 = vmul.f32 %v242, %v245
    %v257 = vperm.slane %v31, 0
    %v258 = vlaneseq
    %v259 = vshrl.u32 %v258, 7
    %261 = vset.pattern.permute.xlu0 %v259
    %262 = vperm.xlu0 %261, %v257
    %v263 = vpop.permute.xlu0 %262
    %v264 = vlaneseq
    %v265 = vshrl.u32 %v264, 7
    %v266 = vadd.s32 %v265, 8
    %267 = vset.pattern.permute.xlu0 %v266
    %268 = vperm.xlu0 %267, %v257
    %v269 = vpop.permute.xlu0 %268
    %v270 = vlaneseq
    %v271 = vshrl.u32 %v270, 7
    %v272 = vadd.s32 %v271, 16
    %273 = vset.pattern.permute.xlu0 %v272
    %274 = vperm.xlu0 %273, %v257
    %v275 = vpop.permute.xlu0 %274
    %v276 = vlaneseq
    %v277 = vshrl.u32 %v276, 7
    %v278 = vadd.s32 %v277, 24
    %279 = vset.pattern.permute.xlu0 %v278
    %280 = vperm.xlu0 %279, %v257
    %v281 = vpop.permute.xlu0 %280
    %v282 = vperm.slane %v31, 1
    %v283 = vlaneseq
    %v284 = vshrl.u32 %v283, 7
    %286 = vset.pattern.permute.xlu0 %v284
    %287 = vperm.xlu0 %286, %v282
    %v288 = vpop.permute.xlu0 %287
    %v289 = vlaneseq
    %v290 = vshrl.u32 %v289, 7
    %v291 = vadd.s32 %v290, 8
    %292 = vset.pattern.permute.xlu0 %v291
    %293 = vperm.xlu0 %292, %v282
    %v294 = vpop.permute.xlu0 %293
    %v295 = vlaneseq
    %v296 = vshrl.u32 %v295, 7
    %v297 = vadd.s32 %v296, 16
    %298 = vset.pattern.permute.xlu0 %v297
    %299 = vperm.xlu0 %298, %v282
    %v300 = vpop.permute.xlu0 %299
    %v301 = vlaneseq
    %v302 = vshrl.u32 %v301, 7
    %v303 = vadd.s32 %v302, 24
    %304 = vset.pattern.permute.xlu0 %v303
    %305 = vperm.xlu0 %304, %v282
    %v306 = vpop.permute.xlu0 %305
    %v307 = vperm.slane %v31, 2
    %v308 = vlaneseq
    %v309 = vshrl.u32 %v308, 7
    %311 = vset.pattern.permute.xlu0 %v309
    %312 = vperm.xlu0 %311, %v307
    %v313 = vpop.permute.xlu0 %312
    %v314 = vlaneseq
    %v315 = vshrl.u32 %v314, 7
    %v316 = vadd.s32 %v315, 8
    %317 = vset.pattern.permute.xlu0 %v316
    %318 = vperm.xlu0 %317, %v307
    %v319 = vpop.permute.xlu0 %318
    %v320 = vlaneseq
    %v321 = vshrl.u32 %v320, 7
    %v322 = vadd.s32 %v321, 16
    %323 = vset.pattern.permute.xlu0 %v322
    %324 = vperm.xlu0 %323, %v307
    %v325 = vpop.permute.xlu0 %324
    %v326 = vlaneseq
    %v327 = vshrl.u32 %v326, 7
    %v328 = vadd.s32 %v327, 24
    %329 = vset.pattern.permute.xlu0 %v328
    %330 = vperm.xlu0 %329, %v307
    %v331 = vpop.permute.xlu0 %330
    %v332 = vperm.slane %v31, 3
    %v333 = vlaneseq
    %v334 = vshrl.u32 %v333, 7
    %336 = vset.pattern.permute.xlu0 %v334
    %337 = vperm.xlu0 %336, %v332
    %v338 = vpop.permute.xlu0 %337
    %v339 = vlaneseq
    %v340 = vshrl.u32 %v339, 7
    %v341 = vadd.s32 %v340, 8
    %342 = vset.pattern.permute.xlu0 %v341
    %343 = vperm.xlu0 %342, %v332
    %v344 = vpop.permute.xlu0 %343
    %v345 = vlaneseq
    %v346 = vshrl.u32 %v345, 7
    %v347 = vadd.s32 %v346, 16
    %348 = vset.pattern.permute.xlu0 %v347
    %349 = vperm.xlu0 %348, %v332
    %v350 = vpop.permute.xlu0 %349
    %v351 = vlaneseq
    %v352 = vshrl.u32 %v351, 7
    %v353 = vadd.s32 %v352, 24
    %354 = vset.pattern.permute.xlu0 %v353
    %355 = vperm.xlu0 %354, %v332
    %v356 = vpop.permute.xlu0 %355
    %v373 = vmul.f32 %v248, %v263
    %v374 = vmul.f32 %v249, %v269
    %v375 = vmul.f32 %v250, %v275
    %v376 = vmul.f32 %v251, %v281
    %v377 = vmul.f32 %v248, %v288
    %v378 = vmul.f32 %v249, %v294
    %v379 = vmul.f32 %v250, %v300
    %v380 = vmul.f32 %v251, %v306
    %v381 = vmul.f32 %v248, %v313
    %v382 = vmul.f32 %v249, %v319
    %v383 = vmul.f32 %v250, %v325
    %v384 = vmul.f32 %v251, %v331
    %v385 = vmul.f32 %v248, %v338
    %v386 = vmul.f32 %v249, %v344
    %v387 = vmul.f32 %v250, %v350
    %v388 = vmul.f32 %v251, %v356
    %v389 = vmul.f32 %v252, %v263
    %v390 = vmul.f32 %v253, %v269
    %v391 = vmul.f32 %v254, %v275
    %v392 = vmul.f32 %v255, %v281
    %v393 = vmul.f32 %v252, %v288
    %v394 = vmul.f32 %v253, %v294
    %v395 = vmul.f32 %v254, %v300
    %v396 = vmul.f32 %v255, %v306
    %v397 = vmul.f32 %v252, %v313
    %v398 = vmul.f32 %v253, %v319
    %v399 = vmul.f32 %v254, %v325
    %v400 = vmul.f32 %v255, %v331
    %v401 = vmul.f32 %v252, %v338
    %v402 = vmul.f32 %v253, %v344
    %v403 = vmul.f32 %v254, %v350
    %v404 = vmul.f32 %v255, %v356
    %437 = vset.pattern.permute.xlu0 0
    %438 = vperm.xlu0 %437, %v373
    %v439 = vpop.permute.xlu0 %438
    %440 = vset.pattern.permute.xlu0 0
    %441 = vperm.xlu0 %440, %v374
    %v442 = vpop.permute.xlu0 %441
    %443 = vset.pattern.permute.xlu0 0
    %444 = vperm.xlu0 %443, %v375
    %v445 = vpop.permute.xlu0 %444
    %446 = vset.pattern.permute.xlu0 0
    %447 = vperm.xlu0 %446, %v376
    %v448 = vpop.permute.xlu0 %447
    %449 = vset.pattern.permute.xlu0 0
    %450 = vperm.xlu0 %449, %v377
    %v451 = vpop.permute.xlu0 %450
    %452 = vset.pattern.permute.xlu0 0
    %453 = vperm.xlu0 %452, %v378
    %v454 = vpop.permute.xlu0 %453
    %455 = vset.pattern.permute.xlu0 0
    %456 = vperm.xlu0 %455, %v379
    %v457 = vpop.permute.xlu0 %456
    %458 = vset.pattern.permute.xlu0 0
    %459 = vperm.xlu0 %458, %v380
    %v460 = vpop.permute.xlu0 %459
    %461 = vset.pattern.permute.xlu0 0
    %462 = vperm.xlu0 %461, %v381
    %v463 = vpop.permute.xlu0 %462
    %464 = vset.pattern.permute.xlu0 0
    %465 = vperm.xlu0 %464, %v382
    %v466 = vpop.permute.xlu0 %465
    %467 = vset.pattern.permute.xlu0 0
    %468 = vperm.xlu0 %467, %v383
    %v469 = vpop.permute.xlu0 %468
    %470 = vset.pattern.permute.xlu0 0
    %471 = vperm.xlu0 %470, %v384
    %v472 = vpop.permute.xlu0 %471
    %473 = vset.pattern.permute.xlu0 0
    %474 = vperm.xlu0 %473, %v385
    %v475 = vpop.permute.xlu0 %474
    %476 = vset.pattern.permute.xlu0 0
    %477 = vperm.xlu0 %476, %v386
    %v478 = vpop.permute.xlu0 %477
    %479 = vset.pattern.permute.xlu0 0
    %480 = vperm.xlu0 %479, %v387
    %v481 = vpop.permute.xlu0 %480
    %482 = vset.pattern.permute.xlu0 0
    %483 = vperm.xlu0 %482, %v388
    %v484 = vpop.permute.xlu0 %483
    %485 = vset.pattern.permute.xlu0 0
    %486 = vperm.xlu0 %485, %v389
    %v487 = vpop.permute.xlu0 %486
    %488 = vset.pattern.permute.xlu0 0
    %489 = vperm.xlu0 %488, %v390
    %v490 = vpop.permute.xlu0 %489
    %491 = vset.pattern.permute.xlu0 0
    %492 = vperm.xlu0 %491, %v391
    %v493 = vpop.permute.xlu0 %492
    %494 = vset.pattern.permute.xlu0 0
    %495 = vperm.xlu0 %494, %v392
    %v496 = vpop.permute.xlu0 %495
    %497 = vset.pattern.permute.xlu0 0
    %498 = vperm.xlu0 %497, %v393
    %v499 = vpop.permute.xlu0 %498
    %500 = vset.pattern.permute.xlu0 0
    %501 = vperm.xlu0 %500, %v394
    %v502 = vpop.permute.xlu0 %501
    %503 = vset.pattern.permute.xlu0 0
    %504 = vperm.xlu0 %503, %v395
    %v505 = vpop.permute.xlu0 %504
    %506 = vset.pattern.permute.xlu0 0
    %507 = vperm.xlu0 %506, %v396
    %v508 = vpop.permute.xlu0 %507
    %509 = vset.pattern.permute.xlu0 0
    %510 = vperm.xlu0 %509, %v397
    %v511 = vpop.permute.xlu0 %510
    %512 = vset.pattern.permute.xlu0 0
    %513 = vperm.xlu0 %512, %v398
    %v514 = vpop.permute.xlu0 %513
    %515 = vset.pattern.permute.xlu0 0
    %516 = vperm.xlu0 %515, %v399
    %v517 = vpop.permute.xlu0 %516
    %518 = vset.pattern.permute.xlu0 0
    %519 = vperm.xlu0 %518, %v400
    %v520 = vpop.permute.xlu0 %519
    %521 = vset.pattern.permute.xlu0 0
    %522 = vperm.xlu0 %521, %v401
    %v523 = vpop.permute.xlu0 %522
    %524 = vset.pattern.permute.xlu0 0
    %525 = vperm.xlu0 %524, %v402
    %v526 = vpop.permute.xlu0 %525
    %527 = vset.pattern.permute.xlu0 0
    %528 = vperm.xlu0 %527, %v403
    %v529 = vpop.permute.xlu0 %528
    %530 = vset.pattern.permute.xlu0 0
    %531 = vperm.xlu0 %530, %v404
    %v532 = vpop.permute.xlu0 %531
    %v533 = vlaneseq
    %v534 = vand.u32 %v533, 127
    %v535 = vperm.slane %v439, %v534
    %v536 = vadd.s32 %v534, 4294967288
    %v537 = vperm.slane %v442, %v536
    %vm538 = vcmask 130112
    %v539 = vsel %vm538, %v537, %v535
    %v540 = vadd.s32 %v534, 4294967280
    %v541 = vperm.slane %v445, %v540
    %vm542 = vcmask 195712
    %v543 = vsel %vm542, %v541, %v539
    %v544 = vadd.s32 %v534, 4294967272
    %v545 = vperm.slane %v448, %v544
    %vm546 = vcmask 261312
    %v547 = vsel %vm546, %v545, %v543
    %v548 = vperm.slane %v451, %v534
    %v549 = vperm.slane %v454, %v536
    %v550 = vsel %vm538, %v549, %v548
    %v551 = vperm.slane %v457, %v540
    %v552 = vsel %vm542, %v551, %v550
    %v553 = vperm.slane %v460, %v544
    %v554 = vsel %vm546, %v553, %v552
    %v555 = vperm.slane %v463, %v534
    %v556 = vperm.slane %v466, %v536
    %v557 = vsel %vm538, %v556, %v555
    %v558 = vperm.slane %v469, %v540
    %v559 = vsel %vm542, %v558, %v557
    %v560 = vperm.slane %v472, %v544
    %v561 = vsel %vm546, %v560, %v559
    %v562 = vperm.slane %v475, %v534
    %v563 = vperm.slane %v478, %v536
    %v564 = vsel %vm538, %v563, %v562
    %v565 = vperm.slane %v481, %v540
    %v566 = vsel %vm542, %v565, %v564
    %v567 = vperm.slane %v484, %v544
    %v568 = vsel %vm546, %v567, %v566
    %v569 = vperm.slane %v487, %v534
    %v570 = vperm.slane %v490, %v536
    %v571 = vsel %vm538, %v570, %v569
    %v572 = vperm.slane %v493, %v540
    %v573 = vsel %vm542, %v572, %v571
    %v574 = vperm.slane %v496, %v544
    %v575 = vsel %vm546, %v574, %v573
    %v576 = vperm.slane %v499, %v534
    %v577 = vperm.slane %v502, %v536
    %v578 = vsel %vm538, %v577, %v576
    %v579 = vperm.slane %v505, %v540
    %v580 = vsel %vm542, %v579, %v578
    %v581 = vperm.slane %v508, %v544
    %v582 = vsel %vm546, %v581, %v580
    %v583 = vperm.slane %v511, %v534
    %v584 = vperm.slane %v514, %v536
    %v585 = vsel %vm538, %v584, %v583
    %v586 = vperm.slane %v517, %v540
    %v587 = vsel %vm542, %v586, %v585
    %v588 = vperm.slane %v520, %v544
    %v589 = vsel %vm546, %v588, %v587
    %v590 = vperm.slane %v523, %v534
    %v591 = vperm.slane %v526, %v536
    %v592 = vsel %vm538, %v591, %v590
    %v593 = vperm.slane %v529, %v540
    %v594 = vsel %vm542, %v593, %v592
    %v595 = vperm.slane %v532, %v544
    %v596 = vsel %vm546, %v595, %v594
    %v597 = vsel %vm142, %v554, %v547
    %vm598 = vcmask 1042434
    %v599 = vsel %vm598, %v561, %v597
    %vm600 = vcmask 1043459
    %v601 = vsel %vm600, %v568, %v599
    %v602 = vsel %vm142, %v582, %v575
    %v603 = vsel %vm598, %v589, %v602
    %v604 = vsel %vm600, %v596, %v603
    %vm607 = vcmask 257024
    %v608 = vsel %vm607, %v601, 0.0
    %609 = vadd.xlane.f32.xlu0 %v608
    %v610 = vpop.xlane.xlu0 %609
    %v611 = vsel %vm607, %v604, 0.0
    %612 = vadd.xlane.f32.xlu0 %v611
    %v613 = vpop.xlane.xlu0 %612
    %v614 = vperm.slane %v34, 0
    %v616 = vlaneseq
    %v617 = vshrl.u32 %v616, 7
    %619 = vset.pattern.permute.xlu0 %v617
    %620 = vperm.xlu0 %619, %v614
    %v621 = vpop.permute.xlu0 %620
    %v623 = vadd.f32 %v610, %v621
    %v624 = vadd.f32 %v613, %v621
    %627 = vset.pattern.permute.xlu0 0
    %628 = vperm.xlu0 %627, %v623
    %v629 = vpop.permute.xlu0 %628
    %630 = vset.pattern.permute.xlu0 0
    %631 = vperm.xlu0 %630, %v624
    %v632 = vpop.permute.xlu0 %631
    %v633 = vperm.slane %v629, %v534
    %v634 = vperm.slane %v632, %v534
    %v635 = vsel %vm142, %v634, %v633
    %vm637 = vcmask 25600
    %v638 = vsel %vm637, %v635, 0.0
    %639 = vadd.xlane.f32.xlu0 %v638
    %v640 = vpop.xlane.xlu0 %639
    %v641 = vrcp.pop 4.0
    %v642 = vmul.f32 4.0, %v641
    %v643 = vsub.f32 1.0, %v642
    %v644 = vmul.f32 %v641, %v643
    %v645 = vadd.f32 %v641, %v644
    %vm646 = vweird.f32 %v641
    %v647 = vsel %vm646, %v641, %v645
    %v648 = vmul.f32 %v640, %v647
    %v650 = vperm.slane %v648, 0
    %v651 = vperm.slane %v648, 1
    %v654 = vsub.f32 %v623, %v650
    %v655 = vsub.f32 %v624, %v651
    %v656 = vmul.f32 %v654, %v654
    %v657 = vmul.f32 %v655, %v655
    %660 = vset.pattern.permute.xlu0 0
    %661 = vperm.xlu0 %660, %v656
    %v662 = vpop.permute.xlu0 %661
    %663 = vset.pattern.permute.xlu0 0
    %664 = vperm.xlu0 %663, %v657
    %v665 = vpop.permute.xlu0 %664
    %v666 = vperm.slane %v662, %v534
    %v667 = vperm.slane %v665, %v534
    %v668 = vsel %vm142, %v667, %v666
    %v670 = vsel %vm637, %v668, 0.0
    %671 = vadd.xlane.f32.xlu0 %v670
    %v672 = vpop.xlane.xlu0 %671
    %v673 = vmul.f32 %v672, %v647
    %v674 = vadd.f32 %v673, 1e-05
    %v675 = vrsqrt.pop %v674
    %v676 = vmul.f32 %v675, %v674
    %v677 = vmul.f32 %v676, %v675
    %v678 = vmul.f32 0.5, %v677
    %v679 = vsub.f32 1.5, %v678
    %v680 = vmul.f32 %v675, %v679
    %vm681 = vweird.f32 %v674
    %vm682 = vweird.f32 %v675
    %vm683 = vmor %vm681, %vm682
    %v684 = vsel %vm683, %v675, %v680
    %v686 = vperm.slane %v684, 0
    %v687 = vperm.slane %v684, 1
    %v690 = vmul.f32 %v654, %v686
    %v691 = vmul.f32 %v655, %v687
    %v692 = vperm.slane %v35, 0
    %v694 = vlaneseq
    %v695 = vshrl.u32 %v694, 7
    %697 = vset.pattern.permute.xlu0 %v695
    %698 = vperm.xlu0 %697, %v692
    %v699 = vpop.permute.xlu0 %698
    %v701 = vmul.f32 %v690, %v699
    %v702 = vmul.f32 %v691, %v699
    %v703 = vperm.slane %v36, 0
    %v705 = vlaneseq
    %v706 = vshrl.u32 %v705, 7
    %708 = vset.pattern.permute.xlu0 %v706
    %709 = vperm.xlu0 %708, %v703
    %v710 = vpop.permute.xlu0 %709
    %v712 = vadd.f32 %v701, %v710
    %v713 = vadd.f32 %v702, %v710
    %v714 = vmax.f32 %v712, 0.0
    %v715 = vmax.f32 %v713, 0.0
    %717 = vset.pattern.permute.xlu0 0
    %718 = vperm.xlu0 %717, %v714
    %v719 = vpop.permute.xlu0 %718
    %722 = vset.pattern.permute.xlu0 0
    %723 = vperm.xlu0 %722, %v715
    %v724 = vpop.permute.xlu0 %723
    %v726 = vmul.f32 %v719, %v32
    %v727 = vmul.f32 %v724, %v32
    %v728 = vsel %vm607, %v726, 0.0
    %v729 = vrot.slane %v728, 4
    %v730 = vadd.f32 %v728, %v729
    %v731 = vrot.slane %v730, 2
    %v732 = vadd.f32 %v730, %v731
    %v733 = vrot.slane %v732, 1
    %v734 = vadd.f32 %v732, %v733
    %v735 = vsel %vm607, %v727, 0.0
    %v736 = vrot.slane %v735, 4
    %v737 = vadd.f32 %v735, %v736
    %v738 = vrot.slane %v737, 2
    %v739 = vadd.f32 %v737, %v738
    %v740 = vrot.slane %v739, 1
    %v741 = vadd.f32 %v739, %v740
    %v742 = vperm.slane %v33, 0
    %v743 = vadd.f32 %v734, %v742
    %v744 = vadd.f32 %v741, %v742
    %v745 = vperm.slane %v743, 0
    %v746 = vlaneseq
    %v747 = vshrl.u32 %v746, 7
    %749 = vset.pattern.permute.xlu0 %v747
    %750 = vperm.xlu0 %749, %v745
    %v751 = vpop.permute.xlu0 %750
    %v752 = vlaneseq
    %v753 = vshrl.u32 %v752, 7
    %v754 = vadd.s32 %v753, 8
    %755 = vset.pattern.permute.xlu0 %v754
    %756 = vperm.xlu0 %755, %v745
    %v757 = vpop.permute.xlu0 %756
    %v758 = vlaneseq
    %v759 = vshrl.u32 %v758, 7
    %v760 = vadd.s32 %v759, 16
    %761 = vset.pattern.permute.xlu0 %v760
    %762 = vperm.xlu0 %761, %v745
    %v763 = vpop.permute.xlu0 %762
    %v764 = vlaneseq
    %v765 = vshrl.u32 %v764, 7
    %v766 = vadd.s32 %v765, 24
    %767 = vset.pattern.permute.xlu0 %v766
    %768 = vperm.xlu0 %767, %v745
    %v769 = vpop.permute.xlu0 %768
    %v770 = vperm.slane %v744, 0
    %v771 = vlaneseq
    %v772 = vshrl.u32 %v771, 7
    %774 = vset.pattern.permute.xlu0 %v772
    %775 = vperm.xlu0 %774, %v770
    %v776 = vpop.permute.xlu0 %775
    %v777 = vlaneseq
    %v778 = vshrl.u32 %v777, 7
    %v779 = vadd.s32 %v778, 8
    %780 = vset.pattern.permute.xlu0 %v779
    %781 = vperm.xlu0 %780, %v770
    %v782 = vpop.permute.xlu0 %781
    %v783 = vlaneseq
    %v784 = vshrl.u32 %v783, 7
    %v785 = vadd.s32 %v784, 16
    %786 = vset.pattern.permute.xlu0 %v785
    %787 = vperm.xlu0 %786, %v770
    %v788 = vpop.permute.xlu0 %787
    %v789 = vlaneseq
    %v790 = vshrl.u32 %v789, 7
    %v791 = vadd.s32 %v790, 24
    %792 = vset.pattern.permute.xlu0 %v791
    %793 = vperm.xlu0 %792, %v770
    %v794 = vpop.permute.xlu0 %793
    %v795 = vadd.f32 %v42, %v751
    %v796 = vadd.f32 %v43, %v751
    %v797 = vadd.f32 %v44, %v757
    %v798 = vadd.f32 %v45, %v757
    %v799 = vadd.f32 %v46, %v763
    %v800 = vadd.f32 %v47, %v763
    %v801 = vadd.f32 %v48, %v769
    %v802 = vadd.f32 %v49, %v769
    %v803 = vadd.f32 %v50, %v776
    %v804 = vadd.f32 %v51, %v776
    %v805 = vadd.f32 %v52, %v782
    %v806 = vadd.f32 %v53, %v782
    %v807 = vadd.f32 %v54, %v788
    %v808 = vadd.f32 %v55, %v788
    %v809 = vadd.f32 %v56, %v794
    %v810 = vadd.f32 %v57, %v794
    %811 = vst [vmem:[#allocation5] sm:$0xff] %v795
    %812 = vst [vmem:[#allocation5 + $0x8] sm:$0xff] %v796
    %813 = vst [vmem:[#allocation5 + $0x10] sm:$0xff] %v797
    %814 = vst [vmem:[#allocation5 + $0x18] sm:$0xff] %v798
    %815 = vst [vmem:[#allocation5 + $0x20] sm:$0xff] %v799
    %816 = vst [vmem:[#allocation5 + $0x28] sm:$0xff] %v800
    %817 = vst [vmem:[#allocation5 + $0x30] sm:$0xff] %v801
    %818 = vst [vmem:[#allocation5 + $0x38] sm:$0xff] %v802
    %819 = vst [vmem:[#allocation5 + $0x40] sm:$0xff] %v803
    %820 = vst [vmem:[#allocation5 + $0x48] sm:$0xff] %v804
    %821 = vst [vmem:[#allocation5 + $0x50] sm:$0xff] %v805
    %822 = vst [vmem:[#allocation5 + $0x58] sm:$0xff] %v806
    %823 = vst [vmem:[#allocation5 + $0x60] sm:$0xff] %v807
    %824 = vst [vmem:[#allocation5 + $0x68] sm:$0xff] %v808
    %825 = vst [vmem:[#allocation5 + $0x70] sm:$0xff] %v809
    %826 = vst [vmem:[#allocation5 + $0x78] sm:$0xff] %v810
    // Predicated region
    $region18: #{tpu_custom_call.1} parent=1 // pred_check
      _
    $region19: #{tpu_custom_call.1} parent=1 // pred_check_branch
      %828 = sbr.rel (0) target = $region21
    $region20: #{tpu_custom_call.1} parent=1 // pred_region
      %830 = vsyncadd [#allocation4], 0
      %s831 = sshll.u32 [#allocation5], 4
      %s832 = int_to_ptr.vmem [resolvable:$true] %s831
      %s833 = sshll.u32 %s3, 4
      %s834 = int_to_ptr.hbm [resolvable:$true] %s833
      %839 = dma.vmem_to_hbm [thread:$0]  %s832, 2048, %s834, [#allocation4], 256, 256, 16
    $region21: #{tpu_custom_call.1} parent=1 // pred_fallthru
      _
    // Predicated region
    $region22: #{tpu_custom_call.1} parent=1 // pred_check
      _
    $region23: #{tpu_custom_call.1} parent=1 // pred_check_branch
      %841 = sbr.rel (0) target = $region25
    $region24: #{tpu_custom_call.1} parent=1 // pred_region
      %843 = dma.done [#allocation4], 2048
    $region25: #{tpu_custom_call.1} parent=1 // pred_fallthru
      _
    %844 = vsyncpa [#allocation3], 1
    %845 = vsyncpa [#allocation4], 1

</llo_original>
